<compile_context>
chip_gen: v5e
topology: v5e:2x2
jax: 0.10.0
libtpu: 0.0.40
codegen_flags: <defaults>
</compile_context>

<pallas_src>
import jax
import jax.numpy as jnp
from jax.experimental import pallas as pl
from jax.experimental.pallas import tpu as pltpu


def _mlp_kernel(x_ref, w1_ref, b1_ref, w2_ref, b2_ref, w3_ref, b3_ref, out_ref):
    # x_ref: (1, B) f32 -- batch on lanes.
    x = x_ref[...]

    # Layer 1 on the VPU: contraction depth is 1, so an outer-product broadcast
    # (16,1)*(1,B)+(16,1) is cheaper than a K=1 MXU matmul.
    h1 = jnp.maximum(w1_ref[...] * x + b1_ref[...], 0.0)           # (16, B)

    # Layer 2 on the MXU: (16,16) @ (16,B) -> (16,B), full lane width.
    h2 = jnp.dot(w2_ref[...], h1, preferred_element_type=jnp.float32)
    h2 = jnp.maximum(h2 + b2_ref[...], 0.0)                         # (16, B)

    # Output head: (2,16) @ (16,B) -> (2,B).
    p = jnp.dot(w3_ref[...], h2, preferred_element_type=jnp.float32)
    p = p + b3_ref[...]                                             # (2, B)

    # Row 0 -> mu (identity), row 1 -> sigma = exp(log_sigma).
    # Single lane-dense store of the whole (2, B) slab; exp goes to the EUP
    # (separate issue slot), the select is one VPU op.
    row = jax.lax.broadcasted_iota(jnp.int32, p.shape, 0)
    out_ref[...] = jnp.where(row == 0, p, jnp.exp(p))


def _round_up(n, m):
    return ((n + m - 1) // m) * m


def stochastic_regression(x, params, *, block_cols=2048):
    """x: (N, 1) float32. params dict with W* stored as (in, out). -> (mu, sigma)."""
    N = x.shape[0]
    x_flat = x.reshape(-1).astype(jnp.float32)

    # Samples per grid step: multiple of 128 (lane width), padded if ragged.
    B = min(_round_up(block_cols, 128), _round_up(N, 128))
    Np = _round_up(N, B)
    if Np != N:
        x_flat = jnp.pad(x_flat, (0, Np - N))
    x2d = x_flat.reshape(1, Np)

    # Transposed weights / column biases for the (features, batch) layout.
    w1t = params["W1"].T.astype(jnp.float32)              # (16, 1)
    b1c = params["b1"].reshape(16, 1).astype(jnp.float32)
    w2t = params["W2"].T.astype(jnp.float32)              # (16, 16)
    b2c = params["b2"].reshape(16, 1).astype(jnp.float32)
    w3t = params["W3"].T.astype(jnp.float32)              # (2, 16)
    b3c = params["b3"].reshape(2, 1).astype(jnp.float32)

    grid = (Np // B,)
    const = lambda shape: pl.BlockSpec(shape, lambda i: (0, 0))  # resident weights

    # Purely HBM-bound custom call: ~12 bytes/sample of activation traffic.
    cost = pl.CostEstimate(
        flops=608 * Np,
        transcendentals=Np,
        bytes_accessed=12 * Np + 4 * (16 + 16 + 256 + 16 + 32 + 2),
    )

    out = pl.pallas_call(
        _mlp_kernel,
        out_shape=jax.ShapeDtypeStruct((2, Np), jnp.float32),
        grid_spec=pltpu.PrefetchScalarGridSpec(
            num_scalar_prefetch=0,
            grid=grid,
            in_specs=[
                pl.BlockSpec((1, B), lambda i: (0, i)),   # x column block
                const((16, 1)),                           # W1^T
                const((16, 1)),                           # b1
                const((16, 16)),                          # W2^T
                const((16, 1)),                           # b2
                const((2, 16)),                           # W3^T
                const((2, 1)),                            # b3
            ],
            out_specs=pl.BlockSpec((2, B), lambda i: (0, i)),     # [mu; sigma] slab
        ),
        compiler_params=pltpu.CompilerParams(
            dimension_semantics=("parallel",),
        ),
        cost_estimate=cost,
    )(x2d, w1t, b1c, w2t, b2c, w3t, b3c)

    mu = out[0, :N].reshape(N, 1)
    sigma = out[1, :N].reshape(N, 1)
    return mu, sigma


def init_params(key):
    """Deterministic init matching nn.Linear shapes (stored as (in, out))."""
    k1, k2, k3, k4, k5, k6 = jax.random.split(key, 6)

    def uni(k, shape, fan_in):
        bound = 1.0 / jnp.sqrt(jnp.float32(fan_in))
        return jax.random.uniform(k, shape, jnp.float32, -bound, bound)

    return {
        "W1": uni(k1, (1, 16), 1),
        "b1": uni(k2, (1, 16), 1),
        "W2": uni(k3, (16, 16), 16),
        "b2": uni(k4, (1, 16), 16),
        "W3": uni(k5, (16, 2), 16),
        "b3": uni(k6, (1, 2), 16),
    }


def reference_forward(x, params):
    h1 = jnp.maximum(x @ params["W1"] + params["b1"], 0.0)
    h2 = jnp.maximum(h1 @ params["W2"] + params["b2"], 0.0)
    p = h2 @ params["W3"] + params["b3"]
    return p[:, 0:1], jnp.exp(p[:, 1:2])


if __name__ == "__main__":
    key = jax.random.PRNGKey(0)
    kx, kp = jax.random.split(key)
    params = init_params(kp)

    # Lane-aligned batch: 512 samples, 256 per grid step -> 2 parallel steps
    # (exercises the multi-step pipeline and megacore sharding path).
    N = 512
    x = jax.random.normal(kx, (N, 1), jnp.float32)
    mu, sigma = stochastic_regression(x, params, block_cols=256)
    mu, sigma = jax.block_until_ready((mu, sigma))

    mu_ref, sigma_ref = reference_forward(x, params)
    assert mu.shape == (N, 1) and sigma.shape == (N, 1)
    assert jnp.allclose(mu, mu_ref, atol=1e-5, rtol=1e-5)
    assert jnp.allclose(sigma, sigma_ref, atol=1e-5, rtol=1e-5)

    # Ragged batch exercises the wrapper-side pad/slice path.
    N2 = 300
    x2 = jax.random.normal(jax.random.PRNGKey(1), (N2, 1), jnp.float32)
    mu2, sigma2 = stochastic_regression(x2, params, block_cols=128)
    mu2, sigma2 = jax.block_until_ready((mu2, sigma2))
    mu2_ref, sigma2_ref = reference_forward(x2, params)
    assert jnp.allclose(mu2, mu2_ref, atol=1e-5, rtol=1e-5)
    assert jnp.allclose(sigma2, sigma2_ref, atol=1e-5, rtol=1e-5)

    print("KERNEL_OK")
</pallas_src>

<mosaic_0001>
module attributes {stable_mosaic.version = 11 : i64} {
  func.func @_mlp_kernel(%arg0: i32, %arg1: memref<1x256xf32, #tpu.memory_space<vmem>>, %arg2: memref<16x1xf32, #tpu.memory_space<vmem>>, %arg3: memref<16x1xf32, #tpu.memory_space<vmem>>, %arg4: memref<16x16xf32, #tpu.memory_space<vmem>>, %arg5: memref<16x1xf32, #tpu.memory_space<vmem>>, %arg6: memref<2x16xf32, #tpu.memory_space<vmem>>, %arg7: memref<2x1xf32, #tpu.memory_space<vmem>>, %arg8: memref<2x256xf32, #tpu.memory_space<vmem>>) attributes {dimension_semantics = [#tpu.dimension_semantics<parallel>], iteration_bounds = array<i64: 2>, scalar_prefetch = 0 : i64, scratch_operands = 0 : i64, tpu.core_type = #tpu.core_type<tc>, window_params = [{transform_indices = @transform_0, window_bounds = array<i64: 1, 256>}, {pipeline_mode = #tpu.pipeline_mode<synchronous>, transform_indices = @transform_1, window_bounds = array<i64: 16, 1>}, {pipeline_mode = #tpu.pipeline_mode<synchronous>, transform_indices = @transform_2, window_bounds = array<i64: 16, 1>}, {pipeline_mode = #tpu.pipeline_mode<synchronous>, transform_indices = @transform_3, window_bounds = array<i64: 16, 16>}, {pipeline_mode = #tpu.pipeline_mode<synchronous>, transform_indices = @transform_4, window_bounds = array<i64: 16, 1>}, {pipeline_mode = #tpu.pipeline_mode<synchronous>, transform_indices = @transform_5, window_bounds = array<i64: 2, 16>}, {pipeline_mode = #tpu.pipeline_mode<synchronous>, transform_indices = @transform_6, window_bounds = array<i64: 2, 1>}, {transform_indices = @transform_7, window_bounds = array<i64: 2, 256>}]} {
    %c0 = arith.constant 0 : index
    %c0_0 = arith.constant 0 : index
    %0 = vector.load %arg1[%c0, %c0_0] : memref<1x256xf32, #tpu.memory_space<vmem>>, vector<1x256xf32>
    %c0_1 = arith.constant 0 : index
    %c0_2 = arith.constant 0 : index
    %1 = vector.load %arg2[%c0_1, %c0_2] : memref<16x1xf32, #tpu.memory_space<vmem>>, vector<16x1xf32>
    %2 = vector.broadcast %1 : vector<16x1xf32> to vector<16x256xf32>
    %3 = vector.broadcast %0 : vector<1x256xf32> to vector<16x256xf32>
    %4 = arith.mulf %2, %3 : vector<16x256xf32>
    %c0_3 = arith.constant 0 : index
    %c0_4 = arith.constant 0 : index
    %5 = vector.load %arg3[%c0_3, %c0_4] : memref<16x1xf32, #tpu.memory_space<vmem>>, vector<16x1xf32>
    %6 = vector.broadcast %5 : vector<16x1xf32> to vector<16x256xf32>
    %7 = arith.addf %4, %6 : vector<16x256xf32>
    %cst = arith.constant 0.000000e+00 : f32
    %8 = vector.broadcast %cst : f32 to vector<16x256xf32>
    %9 = arith.maximumf %7, %8 : vector<16x256xf32>
    %c0_5 = arith.constant 0 : index
    %c0_6 = arith.constant 0 : index
    %10 = vector.load %arg4[%c0_5, %c0_6] : memref<16x16xf32, #tpu.memory_space<vmem>>, vector<16x16xf32>
    %cst_7 = arith.constant dense<0.000000e+00> : vector<16x256xf32>
    %11 = tpu.matmul %10, %9, %cst_7 {dimension_numbers = #tpu.dot_dimension_numbers<[1], [0], [0], [1], [0, 0, 1, 1], [], []>} : vector<16x16xf32>, vector<16x256xf32>, vector<16x256xf32> -> vector<16x256xf32>
    %c0_8 = arith.constant 0 : index
    %c0_9 = arith.constant 0 : index
    %12 = vector.load %arg5[%c0_8, %c0_9] : memref<16x1xf32, #tpu.memory_space<vmem>>, vector<16x1xf32>
    %13 = vector.broadcast %12 : vector<16x1xf32> to vector<16x256xf32>
    %14 = arith.addf %11, %13 : vector<16x256xf32>
    %cst_10 = arith.constant 0.000000e+00 : f32
    %15 = vector.broadcast %cst_10 : f32 to vector<16x256xf32>
    %16 = arith.maximumf %14, %15 : vector<16x256xf32>
    %c0_11 = arith.constant 0 : index
    %c0_12 = arith.constant 0 : index
    %17 = vector.load %arg6[%c0_11, %c0_12] : memref<2x16xf32, #tpu.memory_space<vmem>>, vector<2x16xf32>
    %cst_13 = arith.constant dense<0.000000e+00> : vector<2x256xf32>
    %18 = tpu.matmul %17, %16, %cst_13 {dimension_numbers = #tpu.dot_dimension_numbers<[1], [0], [0], [1], [0, 0, 1, 1], [], []>} : vector<2x16xf32>, vector<16x256xf32>, vector<2x256xf32> -> vector<2x256xf32>
    %c0_14 = arith.constant 0 : index
    %c0_15 = arith.constant 0 : index
    %19 = vector.load %arg7[%c0_14, %c0_15] : memref<2x1xf32, #tpu.memory_space<vmem>>, vector<2x1xf32>
    %20 = vector.broadcast %19 : vector<2x1xf32> to vector<2x256xf32>
    %21 = arith.addf %18, %20 : vector<2x256xf32>
    %22 = tpu.iota {dimensions = array<i32: 0>} : vector<2x256xi32>
    %c0_i32 = arith.constant 0 : i32
    %23 = vector.broadcast %c0_i32 : i32 to vector<2x256xi32>
    %24 = arith.cmpi eq, %22, %23 : vector<2x256xi32>
    %25 = math.exp %21 : vector<2x256xf32>
    %26 = arith.select %24, %21, %25 : vector<2x256xi1>, vector<2x256xf32>
    %c0_16 = arith.constant 0 : index
    %c0_17 = arith.constant 0 : index
    %27 = vector.load %arg8[%c0_16, %c0_17] : memref<2x256xf32, #tpu.memory_space<vmem>>, vector<2x256xf32>
    tpu.vector_store %arg8[%c0_16, %c0_17], %26 {strides = array<i32>} : memref<2x256xf32, #tpu.memory_space<vmem>>, vector<2x256xf32>,
    return
  }
  func.func @transform_0(%arg0: i32) -> (i32, i32) {
    %c0_i32 = arith.constant 0 : i32
    %c0_i32_0 = arith.constant 0 : i32
    return %c0_i32, %arg0 : i32, i32
  }
  func.func @transform_1(%arg0: i32) -> (i32, i32) {
    %c0_i32 = arith.constant 0 : i32
    %c0_i32_0 = arith.constant 0 : i32
    %c0_i32_1 = arith.constant 0 : i32
    return %c0_i32, %c0_i32_0 : i32, i32
  }
  func.func @transform_2(%arg0: i32) -> (i32, i32) {
    %c0_i32 = arith.constant 0 : i32
    %c0_i32_0 = arith.constant 0 : i32
    %c0_i32_1 = arith.constant 0 : i32
    return %c0_i32, %c0_i32_0 : i32, i32
  }
  func.func @transform_3(%arg0: i32) -> (i32, i32) {
    %c0_i32 = arith.constant 0 : i32
    %c0_i32_0 = arith.constant 0 : i32
    %c0_i32_1 = arith.constant 0 : i32
    return %c0_i32, %c0_i32_0 : i32, i32
  }
  func.func @transform_4(%arg0: i32) -> (i32, i32) {
    %c0_i32 = arith.constant 0 : i32
    %c0_i32_0 = arith.constant 0 : i32
    %c0_i32_1 = arith.constant 0 : i32
    return %c0_i32, %c0_i32_0 : i32, i32
  }
  func.func @transform_5(%arg0: i32) -> (i32, i32) {
    %c0_i32 = arith.constant 0 : i32
    %c0_i32_0 = arith.constant 0 : i32
    %c0_i32_1 = arith.constant 0 : i32
    return %c0_i32, %c0_i32_0 : i32, i32
  }
  func.func @transform_6(%arg0: i32) -> (i32, i32) {
    %c0_i32 = arith.constant 0 : i32
    %c0_i32_0 = arith.constant 0 : i32
    %c0_i32_1 = arith.constant 0 : i32
    return %c0_i32, %c0_i32_0 : i32, i32
  }
  func.func @transform_7(%arg0: i32) -> (i32, i32) {
    %c0_i32 = arith.constant 0 : i32
    %c0_i32_0 = arith.constant 0 : i32
    return %c0_i32, %arg0 : i32, i32
  }
}

</mosaic_0001>

<llo_original>
// kernel: tpu_custom_call.1
$region0: #{tpu_custom_call.1}
  #allocation0 [shape = 'u32[]', space=smem, size = 0x4, offset = 0x4, fixed_abs, tag = 'smem constant byte address 0x4 - core index']
  #allocation1 [shape = 'u32[72,128]{1,0:T(1,128)}', space=vmem, size = 0x9000, scoped, tag = 'internal scratch']
  %s0 = inlined_call_operand.vmem [shape: f32[1,512], index: 0, kind: input, shape index: {}]
  %s1 = inlined_call_operand.vmem [shape: f32[16,1], index: 1, kind: input, shape index: {}]
  %s2 = inlined_call_operand.vmem [shape: f32[16,1], index: 2, kind: input, shape index: {}]
  %s3 = inlined_call_operand.vmem [shape: f32[16,16], index: 3, kind: input, shape index: {}]
  %s4 = inlined_call_operand.vmem [shape: f32[16,1], index: 4, kind: input, shape index: {}]
  %s5 = inlined_call_operand.vmem [shape: f32[2,16], index: 5, kind: input, shape index: {}]
  %s6 = inlined_call_operand.vmem [shape: f32[2,1], index: 6, kind: input, shape index: {}]
  %s7 = inlined_call_operand.hbm [shape: f32[2,512], index: 7, kind: output, shape index: {}]
  %s8 = sld [smem:[#allocation0]]
  $region61: #{tpu_custom_call.1} parent=0
    _
  %s10 = ssub.s32 1, %s8
  %s11 = scalar_select 0, %s10, %s8
  $region1: #{tpu_custom_call.1} parent=0
    #allocation2 [shape = 'u8[4096]{0}', space=vmem, size = 0x1000, scoped, tag = 'output window, operand 0']
    #allocation3 [shape = 's32[2]{0}', space=sflag, size = 0x8, scoped, tag = 'scoped memory for tpu_custom_call.1']
    %12 = vsyncpa [#allocation3], 0
    %s13 = scalar_lea.sflag [#allocation3], 1
    %14 = vsyncpa %s13, 0
    loop: start=0, step=1, limit=4
    $region2: #{tpu_custom_call.1} parent=1 // loop_pre_header
      _
    $region3: #{tpu_custom_call.1} parent=1 // loop_header
      %s16 = sphi 0, %s20
      %p17 = scmp.ge.s32.totalorder %s16, 4
      %s26 = sphi 0, %s28
      %s29 = sphi 0, %s26
      %s30 = sphi 0, %s29
      %s46 = sphi 0, %s30
      %s50 = sphi 0, %s50
      %s52 = sphi 0, %s50
      %s53 = sphi 0, %s52
      %s67 = sphi 0, %s53
      %s71 = sphi 0, %s71
      %s73 = sphi 0, %s71
      %s74 = sphi 0, %s73
      %s88 = sphi 0, %s74
      %s92 = sphi 0, %s92
      %s94 = sphi 0, %s92
      %s95 = sphi 0, %s94
      %s109 = sphi 0, %s95
      %s113 = sphi 0, %s113
      %s115 = sphi 0, %s113
      %s116 = sphi 0, %s115
      %s130 = sphi 0, %s116
      %s134 = sphi 0, %s134
      %s136 = sphi 0, %s134
      %s137 = sphi 0, %s136
      %s151 = sphi 0, %s137
      %s155 = sphi 0, %s155
      %s157 = sphi 0, %s155
      %s158 = sphi 0, %s157
      %s172 = sphi 0, %s158
      %s178 = sphi 0, %s180
      %s181 = sphi 0, %s178
      %s182 = sphi 0, %s181
      %s198 = sphi 0, %s182
    $region4: #{tpu_custom_call.1} parent=1 // loop_header_branch
      %19 = sbr.rel (%p17) target = $region8
    $region5: #{tpu_custom_call.1} parent=1 // loop_body
      %s21 = ssub.s32 %s16, 1
      %s22 = ssub.s32 %s16, 2
      %s23 = sadd.s32 %s16, 1
      %s24 = ssub.s32 %s16, %s23
      %p25 = scmp.eq.s32.totalorder %s24, 0
      %s27 = sadd.s32 %s26, 1
      %s28 = scalar_select %p25, %s26, %s27
      %p31 = pneg %p25
      %p32 = scmp.eq.s32.totalorder %s16, 1
      %p33 = por %p31, %p32
      %p34 = scmp.ne.s32.totalorder %s26, %s29
      %p35 = scmp.eq.s32.totalorder %s16, 0
      %p36 = por %p34, %p35
      %p37 = scmp.ne.s32.totalorder %s26, %s29
      %p38 = scmp.eq.s32.totalorder %s21, 1
      %p39 = por %p37, %p38
      %p40 = scmp.ne.s32.totalorder %s29, %s30
      %p41 = scmp.eq.s32.totalorder %s21, 0
      %p42 = por %p40, %p41
      %p43 = scmp.ne.s32.totalorder %s29, %s30
      %p44 = scmp.eq.s32.totalorder %s22, 1
      %p45 = por %p43, %p44
      %p47 = scmp.ne.s32.totalorder %s30, %s46
      %p48 = scmp.eq.s32.totalorder %s22, 0
      %p49 = por %p47, %p48
      %s51 = sadd.s32 %s50, 1
      %p54 = scmp.eq.s32.totalorder %s16, 1
      %p55 = scmp.ne.s32.totalorder %s50, %s52
      %p56 = scmp.eq.s32.totalorder %s16, 0
      %p57 = por %p55, %p56
      %p58 = scmp.ne.s32.totalorder %s50, %s52
      %p59 = scmp.eq.s32.totalorder %s21, 1
      %p60 = por %p58, %p59
      %p61 = scmp.ne.s32.totalorder %s52, %s53
      %p62 = scmp.eq.s32.totalorder %s21, 0
      %p63 = por %p61, %p62
      %p64 = scmp.ne.s32.totalorder %s52, %s53
      %p65 = scmp.eq.s32.totalorder %s22, 1
      %p66 = por %p64, %p65
      %p68 = scmp.ne.s32.totalorder %s53, %s67
      %p69 = scmp.eq.s32.totalorder %s22, 0
      %p70 = por %p68, %p69
      %s72 = sadd.s32 %s71, 1
      %p75 = scmp.eq.s32.totalorder %s16, 1
      %p76 = scmp.ne.s32.totalorder %s71, %s73
      %p77 = scmp.eq.s32.totalorder %s16, 0
      %p78 = por %p76, %p77
      %p79 = scmp.ne.s32.totalorder %s71, %s73
      %p80 = scmp.eq.s32.totalorder %s21, 1
      %p81 = por %p79, %p80
      %p82 = scmp.ne.s32.totalorder %s73, %s74
      %p83 = scmp.eq.s32.totalorder %s21, 0
      %p84 = por %p82, %p83
      %p85 = scmp.ne.s32.totalorder %s73, %s74
      %p86 = scmp.eq.s32.totalorder %s22, 1
      %p87 = por %p85, %p86
      %p89 = scmp.ne.s32.totalorder %s74, %s88
      %p90 = scmp.eq.s32.totalorder %s22, 0
      %p91 = por %p89, %p90
      %s93 = sadd.s32 %s92, 1
      %p96 = scmp.eq.s32.totalorder %s16, 1
      %p97 = scmp.ne.s32.totalorder %s92, %s94
      %p98 = scmp.eq.s32.totalorder %s16, 0
      %p99 = por %p97, %p98
      %p100 = scmp.ne.s32.totalorder %s92, %s94
      %p101 = scmp.eq.s32.totalorder %s21, 1
      %p102 = por %p100, %p101
      %p103 = scmp.ne.s32.totalorder %s94, %s95
      %p104 = scmp.eq.s32.totalorder %s21, 0
      %p105 = por %p103, %p104
      %p106 = scmp.ne.s32.totalorder %s94, %s95
      %p107 = scmp.eq.s32.totalorder %s22, 1
      %p108 = por %p106, %p107
      %p110 = scmp.ne.s32.totalorder %s95, %s109
      %p111 = scmp.eq.s32.totalorder %s22, 0
      %p112 = por %p110, %p111
      %s114 = sadd.s32 %s113, 1
      %p117 = scmp.eq.s32.totalorder %s16, 1
      %p118 = scmp.ne.s32.totalorder %s113, %s115
      %p119 = scmp.eq.s32.totalorder %s16, 0
      %p120 = por %p118, %p119
      %p121 = scmp.ne.s32.totalorder %s113, %s115
      %p122 = scmp.eq.s32.totalorder %s21, 1
      %p123 = por %p121, %p122
      %p124 = scmp.ne.s32.totalorder %s115, %s116
      %p125 = scmp.eq.s32.totalorder %s21, 0
      %p126 = por %p124, %p125
      %p127 = scmp.ne.s32.totalorder %s115, %s116
      %p128 = scmp.eq.s32.totalorder %s22, 1
      %p129 = por %p127, %p128
      %p131 = scmp.ne.s32.totalorder %s116, %s130
      %p132 = scmp.eq.s32.totalorder %s22, 0
      %p133 = por %p131, %p132
      %s135 = sadd.s32 %s134, 1
      %p138 = scmp.eq.s32.totalorder %s16, 1
      %p139 = scmp.ne.s32.totalorder %s134, %s136
      %p140 = scmp.eq.s32.totalorder %s16, 0
      %p141 = por %p139, %p140
      %p142 = scmp.ne.s32.totalorder %s134, %s136
      %p143 = scmp.eq.s32.totalorder %s21, 1
      %p144 = por %p142, %p143
      %p145 = scmp.ne.s32.totalorder %s136, %s137
      %p146 = scmp.eq.s32.totalorder %s21, 0
      %p147 = por %p145, %p146
      %p148 = scmp.ne.s32.totalorder %s136, %s137
      %p149 = scmp.eq.s32.totalorder %s22, 1
      %p150 = por %p148, %p149
      %p152 = scmp.ne.s32.totalorder %s137, %s151
      %p153 = scmp.eq.s32.totalorder %s22, 0
      %p154 = por %p152, %p153
      %s156 = sadd.s32 %s155, 1
      %p159 = scmp.eq.s32.totalorder %s16, 1
      %p160 = scmp.ne.s32.totalorder %s155, %s157
      %p161 = scmp.eq.s32.totalorder %s16, 0
      %p162 = por %p160, %p161
      %p163 = scmp.ne.s32.totalorder %s155, %s157
      %p164 = scmp.eq.s32.totalorder %s21, 1
      %p165 = por %p163, %p164
      %p166 = scmp.ne.s32.totalorder %s157, %s158
      %p167 = scmp.eq.s32.totalorder %s21, 0
      %p168 = por %p166, %p167
      %p169 = scmp.ne.s32.totalorder %s157, %s158
      %p170 = scmp.eq.s32.totalorder %s22, 1
      %p171 = por %p169, %p170
      %p173 = scmp.ne.s32.totalorder %s158, %s172
      %p174 = scmp.eq.s32.totalorder %s22, 0
      %p175 = por %p173, %p174
      %s176 = ssub.s32 %s16, %s23
      %p177 = scmp.eq.s32.totalorder %s176, 0
      %s179 = sadd.s32 %s178, 1
      %s180 = scalar_select %p177, %s178, %s179
      %p183 = pneg %p177
      %p184 = scmp.eq.s32.totalorder %s16, 1
      %p185 = por %p183, %p184
      %p186 = scmp.ne.s32.totalorder %s178, %s181
      %p187 = scmp.eq.s32.totalorder %s16, 0
      %p188 = por %p186, %p187
      %p189 = scmp.ne.s32.totalorder %s178, %s181
      %p190 = scmp.eq.s32.totalorder %s21, 1
      %p191 = por %p189, %p190
      %p192 = scmp.ne.s32.totalorder %s181, %s182
      %p193 = scmp.eq.s32.totalorder %s21, 0
      %p194 = por %p192, %p193
      %p195 = scmp.ne.s32.totalorder %s181, %s182
      %p196 = scmp.eq.s32.totalorder %s22, 1
      %p197 = por %p195, %p196
      %p199 = scmp.ne.s32.totalorder %s182, %s198
      %p200 = scmp.eq.s32.totalorder %s22, 0
      %p201 = por %p199, %p200
      %p202 = scmp.le.s32.totalorder 1, %s16
      %p203 = scmp.lt.s32.totalorder %s16, 3
      %p204 = pnand %p202, %p203
      %p205 = pneg %p204
      // Predicated region
      $region9: #{tpu_custom_call.1} parent=5 // pred_check
        _
      $region10: #{tpu_custom_call.1} parent=5 // pred_check_branch
        %207 = sbr.rel (%p204) target = $region12
      $region11: #{tpu_custom_call.1} parent=5 // pred_region
        %s208 = ssub.s32 %s16, 1
        // Predicated region
        $region13: #{tpu_custom_call.1} parent=11 // pred_check
          %p209 = pneg %p63
        $region14: #{tpu_custom_call.1} parent=11 // pred_check_branch
          %211 = sbr.rel (%p209) target = $region16
        $region15: #{tpu_custom_call.1} parent=11 // pred_region
          _
        $region16: #{tpu_custom_call.1} parent=11 // pred_fallthru
          _
        // Predicated region
        $region17: #{tpu_custom_call.1} parent=11 // pred_check
          %p212 = pneg %p84
        $region18: #{tpu_custom_call.1} parent=11 // pred_check_branch
          %214 = sbr.rel (%p212) target = $region20
        $region19: #{tpu_custom_call.1} parent=11 // pred_region
          _
        $region20: #{tpu_custom_call.1} parent=11 // pred_fallthru
          _
        // Predicated region
        $region21: #{tpu_custom_call.1} parent=11 // pred_check
          %p215 = pneg %p105
        $region22: #{tpu_custom_call.1} parent=11 // pred_check_branch
          %217 = sbr.rel (%p215) target = $region24
        $region23: #{tpu_custom_call.1} parent=11 // pred_region
          _
        $region24: #{tpu_custom_call.1} parent=11 // pred_fallthru
          _
        // Predicated region
        $region25: #{tpu_custom_call.1} parent=11 // pred_check
          %p218 = pneg %p126
        $region26: #{tpu_custom_call.1} parent=11 // pred_check_branch
          %220 = sbr.rel (%p218) target = $region28
        $region27: #{tpu_custom_call.1} parent=11 // pred_region
          _
        $region28: #{tpu_custom_call.1} parent=11 // pred_fallthru
          _
        // Predicated region
        $region29: #{tpu_custom_call.1} parent=11 // pred_check
          %p221 = pneg %p147
        $region30: #{tpu_custom_call.1} parent=11 // pred_check_branch
          %223 = sbr.rel (%p221) target = $region32
        $region31: #{tpu_custom_call.1} parent=11 // pred_region
          _
        $region32: #{tpu_custom_call.1} parent=11 // pred_fallthru
          _
        // Predicated region
        $region33: #{tpu_custom_call.1} parent=11 // pred_check
          %p224 = pneg %p168
        $region34: #{tpu_custom_call.1} parent=11 // pred_check_branch
          %226 = sbr.rel (%p224) target = $region36
        $region35: #{tpu_custom_call.1} parent=11 // pred_region
          _
        $region36: #{tpu_custom_call.1} parent=11 // pred_fallthru
          _
      $region12: #{tpu_custom_call.1} parent=5 // pred_fallthru
        _
      %p227 = scmp.lt.s32.totalorder %s16, 2
      // Predicated region
      $region37: #{tpu_custom_call.1} parent=5 // pred_check
        %p228 = pneg %p227
      $region38: #{tpu_custom_call.1} parent=5 // pred_check_branch
        %230 = sbr.rel (%p228) target = $region40
      $region39: #{tpu_custom_call.1} parent=5 // pred_region
        // Predicated region
        $region41: #{tpu_custom_call.1} parent=39 // pred_check
          %p231 = pneg %p36
        $region42: #{tpu_custom_call.1} parent=39 // pred_check_branch
          %233 = sbr.rel (%p231) target = $region44
        $region43: #{tpu_custom_call.1} parent=39 // pred_region
          %s234 = smul.u32 2, %s16
          %p235 = scmp.lt.s32.totalorder %s234, 3
          %s236 = scalar_select %p235, %s234, 3
          %s237 = scalar_lea.vmem %s0, %s236
          %s238 = smul.u32 2, %s16
        $region44: #{tpu_custom_call.1} parent=39 // pred_fallthru
          _
      $region40: #{tpu_custom_call.1} parent=5 // pred_fallthru
        _
      %p239 = scmp.le.s32.totalorder 1, %s16
      %p240 = scmp.lt.s32.totalorder %s16, 3
      %p241 = pnand %p239, %p240
      %p242 = pneg %p241
      // Predicated region
      $region45: #{tpu_custom_call.1} parent=5 // pred_check
        _
      $region46: #{tpu_custom_call.1} parent=5 // pred_check_branch
        %244 = sbr.rel (%p241) target = $region48
      $region47: #{tpu_custom_call.1} parent=5 // pred_region
        %s245 = ssub.s32 %s16, 1
        %s246 = smul.u32 2, %s21
        %p247 = scmp.lt.s32.totalorder %s246, 3
        %s248 = scalar_select %p247, %s246, 3
        %s249 = scalar_lea.vmem %s0, %s248
        %p250 = pneg %p42
        %p251 = pneg %p39
        %p252 = pneg %p63
        %p253 = pneg %p60
        %p254 = pneg %p84
        %p255 = pneg %p81
        %p256 = pneg %p105
        %p257 = pneg %p102
        %p258 = pneg %p126
        %p259 = pneg %p123
        %p260 = pneg %p147
        %p261 = pneg %p144
        %p262 = pneg %p168
        %p263 = pneg %p165
        %p264 = pneg %p194
        %p265 = pneg %p191
        %s266 = sand.u32 %s181, 1
        %s267 = scalar_lea.sflag [#allocation3], %s266
        %s268 = sand.u32 %s181, 1
        %s269 = smul.addr %s268, 4
        %s270 = scalar_lea.vmem [#allocation2], %s269
        %s271 = smul.u32 2, %s21
        %p272 = scmp.lt.s32.totalorder %s271, 3
        %s273 = scalar_select %p272, %s271, 3
        %s274 = scalar_lea.vmem %s0, %s273
        %s275 = smul.u32 2, %s21
        %s276 = smul.u32 2, %s21
        %v277 = vld [vmem:[%s274] sm:$0x3]
        %v278 = vld [vmem:[%s1] sm:$0xff]
        %v279 = vld [vmem:[%s1 + $0x8] sm:$0xff]
        %281 = vset.pattern.permute.xlu0 0
        %282 = vperm.xlu0 %281, %v278
        %v283 = vpop.permute.xlu0 %282
        %286 = vset.pattern.permute.xlu0 0
        %287 = vperm.xlu0 %286, %v279
        %v288 = vpop.permute.xlu0 %287
        %v291 = vperm.slane %v277, 0
        %v292 = vperm.slane %v277, 1
        %v295 = vmul.f32 %v283, %v291
        %v296 = vmul.f32 %v283, %v292
        %v297 = vmul.f32 %v288, %v291
        %v298 = vmul.f32 %v288, %v292
        %v299 = vld [vmem:[%s2] sm:$0xff]
        %v300 = vld [vmem:[%s2 + $0x8] sm:$0xff]
        %302 = vset.pattern.permute.xlu0 0
        %303 = vperm.xlu0 %302, %v299
        %v304 = vpop.permute.xlu0 %303
        %307 = vset.pattern.permute.xlu0 0
        %308 = vperm.xlu0 %307, %v300
        %v309 = vpop.permute.xlu0 %308
        %v311 = vadd.f32 %v295, %v304
        %v312 = vadd.f32 %v296, %v304
        %v313 = vadd.f32 %v297, %v309
        %v314 = vadd.f32 %v298, %v309
        %v315 = vmax.f32 %v311, 0.0
        %v316 = vmax.f32 %v312, 0.0
        %v317 = vmax.f32 %v313, 0.0
        %v318 = vmax.f32 %v314, 0.0
        %v319 = vld [vmem:[%s3] sm:$0xff]
        %v320 = vld [vmem:[%s3 + $0x8] sm:$0xff]
        %v321 = vld [vmem:[%s4] sm:$0xff]
        %v322 = vld [vmem:[%s4 + $0x8] sm:$0xff]
        %324 = vset.pattern.permute.xlu0 0
        %325 = vperm.xlu0 %324, %v321
        %v326 = vpop.permute.xlu0 %325
        %329 = vset.pattern.permute.xlu0 0
        %330 = vperm.xlu0 %329, %v322
        %v331 = vpop.permute.xlu0 %330
        %vm333 = vcmask 130048
        %v335 = vsel %vm333, %v319, 0
        %v338 = vsel %vm333, %v320, 0
        %340 = vmatpush.msra.mxu0 0.0
        %341 = vmatpush.msra.mxu0 0.0
        %342 = vmatpush.msra.mxu0 0.0
        %343 = vmatpush.msra.mxu0 0.0
        %344 = vmatpush.msra.mxu0 0.0
        %345 = vmatpush.msra.mxu0 0.0
        %346 = vmatpush.msra.mxu0 0.0
        %347 = vmatpush.msra.mxu0 0.0
        %348 = vmatpush.msra.mxu0 0.0
        %349 = vmatpush.msra.mxu0 0.0
        %350 = vmatpush.msra.mxu0 0.0
        %351 = vmatpush.msra.mxu0 0.0
        %352 = vmatpush.msra.mxu0 0.0
        %353 = vmatpush.msra.mxu0 0.0
        %354 = vmatpush.msra.mxu0 %v317
        %355 = vmatpush.msra.mxu0 %v315
        %356 = vmatmul.f32.gmra.mxu0 %v335
        %v357 = vpop.f32.mrf.mxu0
        %v358 = vadd.f32 %v326, %v357
        %359 = vmatmul.f32.gmra.mxu0 %v338
        %v360 = vpop.f32.mrf.mxu0
        %v361 = vadd.f32 %v331, %v360
        %362 = vdwg.mxu0
        %363 = vmatpush.msra.mxu0 0.0
        %364 = vmatpush.msra.mxu0 0.0
        %365 = vmatpush.msra.mxu0 0.0
        %366 = vmatpush.msra.mxu0 0.0
        %367 = vmatpush.msra.mxu0 0.0
        %368 = vmatpush.msra.mxu0 0.0
        %369 = vmatpush.msra.mxu0 0.0
        %370 = vmatpush.msra.mxu0 0.0
        %371 = vmatpush.msra.mxu0 0.0
        %372 = vmatpush.msra.mxu0 0.0
        %373 = vmatpush.msra.mxu0 0.0
        %374 = vmatpush.msra.mxu0 0.0
        %375 = vmatpush.msra.mxu0 0.0
        %376 = vmatpush.msra.mxu0 0.0
        %377 = vmatpush.msra.mxu0 %v318
        %378 = vmatpush.msra.mxu0 %v316
        %379 = vmatmul.f32.gmra.mxu0 %v335
        %v380 = vpop.f32.mrf.mxu0
        %v381 = vadd.f32 %v326, %v380
        %382 = vmatmul.f32.gmra.mxu0 %v338
        %v383 = vpop.f32.mrf.mxu0
        %v384 = vadd.f32 %v331, %v383
        %385 = vdwg.mxu0
        %v386 = vmax.f32 %v358, 0.0
        %v387 = vmax.f32 %v381, 0.0
        %v388 = vmax.f32 %v361, 0.0
        %v389 = vmax.f32 %v384, 0.0
        %v390 = vld [vmem:[%s5] sm:$0x3]
        %v391 = vld [vmem:[%s6] sm:$0x3]
        %393 = vset.pattern.permute.xlu0 0
        %394 = vperm.xlu0 %393, %v391
        %v395 = vpop.permute.xlu0 %394
        %v398 = vsel %vm333, %v390, 0
        %400 = vmatpush.msra.mxu0 0.0
        %401 = vmatpush.msra.mxu0 0.0
        %402 = vmatpush.msra.mxu0 0.0
        %403 = vmatpush.msra.mxu0 0.0
        %404 = vmatpush.msra.mxu0 0.0
        %405 = vmatpush.msra.mxu0 0.0
        %406 = vmatpush.msra.mxu0 0.0
        %407 = vmatpush.msra.mxu0 0.0
        %408 = vmatpush.msra.mxu0 0.0
        %409 = vmatpush.msra.mxu0 0.0
        %410 = vmatpush.msra.mxu0 0.0
        %411 = vmatpush.msra.mxu0 0.0
        %412 = vmatpush.msra.mxu0 0.0
        %413 = vmatpush.msra.mxu0 0.0
        %414 = vmatpush.msra.mxu0 %v388
        %415 = vmatpush.msra.mxu0 %v386
        %416 = vmatmul.f32.gmra.mxu0 %v398
        %v417 = vpop.f32.mrf.mxu0
        %v418 = vadd.f32 %v395, %v417
        %419 = vdwg.mxu0
        %420 = vmatpush.msra.mxu0 0.0
        %421 = vmatpush.msra.mxu0 0.0
        %422 = vmatpush.msra.mxu0 0.0
        %423 = vmatpush.msra.mxu0 0.0
        %424 = vmatpush.msra.mxu0 0.0
        %425 = vmatpush.msra.mxu0 0.0
        %426 = vmatpush.msra.mxu0 0.0
        %427 = vmatpush.msra.mxu0 0.0
        %428 = vmatpush.msra.mxu0 0.0
        %429 = vmatpush.msra.mxu0 0.0
        %430 = vmatpush.msra.mxu0 0.0
        %431 = vmatpush.msra.mxu0 0.0
        %432 = vmatpush.msra.mxu0 0.0
        %433 = vmatpush.msra.mxu0 0.0
        %434 = vmatpush.msra.mxu0 %v389
        %435 = vmatpush.msra.mxu0 %v387
        %436 = vmatmul.f32.gmra.mxu0 %v398
        %v437 = vpop.f32.mrf.mxu0
        %v438 = vadd.f32 %v395, %v437
        %439 = vdwg.mxu0
        %v440 = vlaneseq
        %v441 = vshrl.u32 %v440, 7
        %vm442 = vcmp.eq.s32.totalorder %v441, 0
        %v443 = vmul.f32 %v418, 1.442695
        %v444 = vpow.pop %v443
        %v445 = vmul.f32 %v438, 1.442695
        %v446 = vpow.pop %v445
        %v447 = vsel %vm442, %v418, %v444
        %v448 = vsel %vm442, %v438, %v446
        %v451 = vrot.slane %v448, 6
        %vm452 = vcmask 1041408
        %v453 = vsel %vm452, %v447, %v451
        %455 = vst [vmem:[%s270] sm:$0xf] %v453
        %s456 = sand.u32 %s181, 1
        %s457 = scalar_lea.sflag [#allocation3], %s456
        %s458 = sand.u32 %s181, 1
        %s459 = smul.addr %s458, 4
        %s460 = scalar_lea.vmem [#allocation2], %s459
        // Predicated region
        $region49: #{tpu_custom_call.1} parent=47 // pred_check
          %p461 = pneg %p191
        $region50: #{tpu_custom_call.1} parent=47 // pred_check_branch
          %463 = sbr.rel (%p461) target = $region52
        $region51: #{tpu_custom_call.1} parent=47 // pred_region
          %s464 = smul.u32 2, %s21
          %466 = vsyncadd %s457, 0
          %s467 = smul.addr %s464, 2
          %s468 = scalar_lea.hbm %s7, %s467
          %s470 = sshll.u32 %s460, 4
          %s471 = int_to_ptr.vmem [resolvable:$true] %s470
          %s472 = sshll.u32 %s468, 4
          %s473 = int_to_ptr.hbm [resolvable:$true] %s472
          %475 = dma.vmem_to_hbm [thread:$0]  %s471, 64, %s473, %s457
        $region52: #{tpu_custom_call.1} parent=47 // pred_fallthru
          _
      $region48: #{tpu_custom_call.1} parent=5 // pred_fallthru
        _
      %p476 = scmp.le.s32.totalorder 2, %s16
      // Predicated region
      $region53: #{tpu_custom_call.1} parent=5 // pred_check
        %p477 = pneg %p476
      $region54: #{tpu_custom_call.1} parent=5 // pred_check_branch
        %479 = sbr.rel (%p477) target = $region56
      $region55: #{tpu_custom_call.1} parent=5 // pred_region
        %s480 = ssub.s32 %s16, 2
        // Predicated region
        $region57: #{tpu_custom_call.1} parent=55 // pred_check
          %p481 = pneg %p197
        $region58: #{tpu_custom_call.1} parent=55 // pred_check_branch
          %483 = sbr.rel (%p481) target = $region60
        $region59: #{tpu_custom_call.1} parent=55 // pred_region
          %s484 = sand.u32 %s182, 1
          %s485 = scalar_lea.sflag [#allocation3], %s484
          %s486 = sand.u32 %s182, 1
          %s487 = smul.addr %s486, 4
          %s488 = scalar_lea.vmem [#allocation2], %s487
          %490 = dma.done %s485, 64
        $region60: #{tpu_custom_call.1} parent=55 // pred_fallthru
          _
      $region56: #{tpu_custom_call.1} parent=5 // pred_fallthru
        _
    $region6: #{tpu_custom_call.1} parent=1 // loop_footer
      %s20 = sadd.s32 1, %s16
    $region7: #{tpu_custom_call.1} parent=1 // loop_footer_branch
      %15 = sbr.rel target = $region3
    $region8: #{tpu_custom_call.1} parent=1 // loop_exit
      _
    %491 = vsyncpa [#allocation3], 1
    %s492 = scalar_lea.sflag [#allocation3], 1
    %493 = vsyncpa %s492, 1

</llo_original>
